<compile_context>
chip_gen: v7x
topology: tpu7x:2x2x1
jax: 0.10.0
libtpu: 0.0.40
codegen_flags: <defaults>
</compile_context>

<pallas_src>
import jax
import jax.numpy as jnp
from jax.experimental import pallas as pl
from jax.experimental.pallas import tpu as pltpu


def _round_up(x, m):
    return (x + m - 1) // m * m


def _silu(x):
    # x * sigmoid(x); divide goes to the EUP via the approx reciprocal.
    return x * pl.reciprocal(1.0 + jnp.exp(-x), approx=True)


# -----------------------------------------------------------------------------
# Kernels.  Table is the W1-prefused embedding (emb @ W1 + b1), bf16, resident.
# -----------------------------------------------------------------------------
def _int_kernel(idx_ref, tab_ref, w2_ref, b2_ref, o_ref):
    """Integer-step path: one bf16 one-hot gather matmul + Linear2 + SiLUs."""
    tile_b = idx_ref.shape[0]
    tp = tab_ref.shape[0]
    steps = jax.lax.broadcasted_iota(jnp.int32, (tile_b, tp), 1)
    onehot = jnp.where(steps == idx_ref[...], 1.0, 0.0).astype(jnp.bfloat16)
    # h = x @ W1 + b1  ==  onehot @ (emb @ W1 + b1): single bf16 MXU pass, f32 acc.
    h = jnp.dot(onehot, tab_ref[...], preferred_element_type=jnp.float32)
    h = _silu(h)
    y = jnp.dot(h.astype(jnp.bfloat16), w2_ref[...],
                preferred_element_type=jnp.float32)
    y = _silu(y + b2_ref[...])
    o_ref[...] = y.astype(o_ref.dtype)


def _lerp_kernel(lf_ref, tab_ref, w2_ref, b2_ref, o_ref):
    """Float-step path: two bf16 one-hot gathers, f32 lerp, Linear2 + SiLUs."""
    tile_b = lf_ref.shape[0]
    tp = tab_ref.shape[0]
    lf = lf_ref[...]                                    # (tile_b, 2) f32: [floor(t), frac]
    low = lf[:, 0:1].astype(jnp.int32)
    frac = lf[:, 1:2]
    high = low + (frac > 0.0).astype(jnp.int32)         # == ceil(t)
    steps = jax.lax.broadcasted_iota(jnp.int32, (tile_b, tp), 1)
    oh_lo = jnp.where(steps == low, 1.0, 0.0).astype(jnp.bfloat16)
    oh_hi = jnp.where(steps == high, 1.0, 0.0).astype(jnp.bfloat16)
    h_lo = jnp.dot(oh_lo, tab_ref[...], preferred_element_type=jnp.float32)
    h_hi = jnp.dot(oh_hi, tab_ref[...], preferred_element_type=jnp.float32)
    h = h_lo + frac * (h_hi - h_lo)                     # lerp stays in f32
    h = _silu(h)
    y = jnp.dot(h.astype(jnp.bfloat16), w2_ref[...],
                preferred_element_type=jnp.float32)
    y = _silu(y + b2_ref[...])
    o_ref[...] = y.astype(o_ref.dtype)


# -----------------------------------------------------------------------------
# Wrapper / pallas_call
# -----------------------------------------------------------------------------
def _tile_b_for_device(B):
    """Big tiles on single-TC v5e/v6e; keep the parallel grid >= 2 on v7x."""
    cap, multi_tc = 512, False
    try:
        kind = jax.devices()[0].device_kind.lower()
        if "v7" in kind:
            cap, multi_tc = 256, True
    except Exception:
        pass
    if multi_tc:
        tile = min(cap, _round_up((B + 1) // 2, 8))
    else:
        tile = min(cap, _round_up(B, 8))
    return max(tile, 8)


def prefuse_params(embedding, params):
    """Fold Linear #1 into the table: gather/lerp commute with a linear map."""
    w1, b1, w2, b2 = params
    T, D = embedding.shape
    emb_proj = jnp.dot(embedding.astype(jnp.float32), w1.astype(jnp.float32),
                       precision=jax.lax.Precision.HIGHEST) + b1.reshape(1, D)
    Tp = _round_up(T, 128)                               # lane-aligned one-hot matmul
    if Tp != T:
        emb_proj = jnp.pad(emb_proj, ((0, Tp - T), (0, 0)))
    return (emb_proj.astype(jnp.bfloat16),               # resident table, bf16
            w2.astype(jnp.bfloat16),                      # resident W2, bf16
            b2.reshape(1, D).astype(jnp.float32))


def diffusion_embedding_fused(step_data, emb_proj, w2b, b2, *, lerp,
                              out_dtype=jnp.float32):
    """step_data: (B, 1) int32 (int path) or (B, 2) f32 [floor(t), frac] (lerp)."""
    B, C = step_data.shape
    Tp, D = emb_proj.shape

    tile_b = _tile_b_for_device(B)
    Bp = _round_up(B, tile_b)
    if Bp != B:
        # Padded rows gather row 0 (frac 0) and are sliced off afterwards.
        step_data = jnp.pad(step_data, ((0, Bp - B), (0, 0)))

    kernel = _lerp_kernel if lerp else _int_kernel
    out = pl.pallas_call(
        kernel,
        out_shape=jax.ShapeDtypeStruct((Bp, D), out_dtype),
        grid_spec=pltpu.PrefetchScalarGridSpec(
            num_scalar_prefetch=0,
            grid=(Bp // tile_b,),
            in_specs=[
                pl.BlockSpec((tile_b, C), lambda i: (i, 0)),   # packed step scalars
                pl.BlockSpec((Tp, D), lambda i: (0, 0)),       # prefused table (resident)
                pl.BlockSpec((D, D), lambda i: (0, 0)),        # W2 (resident, bf16)
                pl.BlockSpec((1, D), lambda i: (0, 0)),        # b2
            ],
            out_specs=pl.BlockSpec((tile_b, D), lambda i: (i, 0)),
        ),
        compiler_params=pltpu.CompilerParams(
            dimension_semantics=("parallel",)),
    )(step_data, emb_proj, w2b, b2)
    return out[:B]


def diffusion_embedding_forward(diffusion_step, embedding, params,
                                out_dtype=jnp.float32):
    """diffusion_step: (B,) int indices or float steps (lerp path)."""
    tab, w2b, b2 = prefuse_params(embedding, params)
    if jnp.issubdtype(diffusion_step.dtype, jnp.integer):
        data = diffusion_step.reshape(-1, 1).astype(jnp.int32)
        return diffusion_embedding_fused(data, tab, w2b, b2, lerp=False,
                                         out_dtype=out_dtype)
    t = diffusion_step.astype(jnp.float32)
    low = jnp.floor(t)
    frac = t - low
    data = jnp.stack([low, frac], axis=-1)               # (B, 2) packed -> one DMA
    return diffusion_embedding_fused(data, tab, w2b, b2, lerp=True,
                                     out_dtype=out_dtype)


# -----------------------------------------------------------------------------
# Module glue (deterministic, built in-script)
# -----------------------------------------------------------------------------
def build_embedding(max_steps):
    steps = jnp.arange(max_steps, dtype=jnp.float32)[:, None]            # (T, 1)
    dims = jnp.arange(64, dtype=jnp.float32)[None, :]                    # (1, 64)
    table = steps * 10.0 ** (dims * 4.0 / 63.0)                          # (T, 64)
    return jnp.concatenate([jnp.sin(table), jnp.cos(table)], axis=1)     # (T, 128)


def init_params(key):
    # Matches nn.Linear(128, 128) default init: U(-1/sqrt(128), 1/sqrt(128)).
    k1, k2, k3, k4 = jax.random.split(key, 4)
    bound = 1.0 / jnp.sqrt(128.0)
    w1 = jax.random.uniform(k1, (128, 128), jnp.float32, -bound, bound)  # [in, out]
    b1 = jax.random.uniform(k2, (1, 128), jnp.float32, -bound, bound)
    w2 = jax.random.uniform(k3, (128, 128), jnp.float32, -bound, bound)
    b2 = jax.random.uniform(k4, (1, 128), jnp.float32, -bound, bound)
    return w1, b1, w2, b2


# -----------------------------------------------------------------------------
# Pure-JAX f32 references (HIGHEST precision matmuls -> true f32 ground truth)
# -----------------------------------------------------------------------------
def _ref_mlp(x, w1, b1, w2, b2):
    hp = jax.lax.Precision.HIGHEST
    h = jnp.dot(x, w1, precision=hp) + b1
    h = h * jax.nn.sigmoid(h)
    y = jnp.dot(h, w2, precision=hp) + b2
    return y * jax.nn.sigmoid(y)


def _reference_int(diffusion_step, embedding, params):
    w1, b1, w2, b2 = params
    x = embedding[diffusion_step]
    return _ref_mlp(x, w1, b1, w2, b2)


def _reference_lerp(t, embedding, params):
    w1, b1, w2, b2 = params
    low_idx = jnp.floor(t).astype(jnp.int32)
    high_idx = jnp.ceil(t).astype(jnp.int32)
    low = embedding[low_idx]
    high = embedding[high_idx]
    x = low + (high - low) * (t - low_idx.astype(t.dtype))[:, None]
    return _ref_mlp(x, w1, b1, w2, b2)


# -----------------------------------------------------------------------------
if __name__ == "__main__":
    max_steps = 50
    batch = 8

    key = jax.random.PRNGKey(0)
    k_idx, k_t, k_params = jax.random.split(key, 3)

    embedding = build_embedding(max_steps)                               # (50, 128)
    params = init_params(k_params)

    # Integer-step path (standard training/inference path).
    steps_int = jax.random.randint(k_idx, (batch,), 0, max_steps, dtype=jnp.int32)
    out_int = jax.block_until_ready(
        diffusion_embedding_forward(steps_int, embedding, params))
    ref_int = _reference_int(steps_int, embedding, params)
    assert out_int.shape == (batch, 128)
    # bf16 table / bf16 second-matmul operands with f32 accumulation -> loosened tol.
    assert jnp.allclose(out_int, ref_int, atol=3e-2, rtol=3e-2), \
        float(jnp.abs(out_int - ref_int).max())

    # Float-step (lerp) path.
    steps_f = jax.random.uniform(k_t, (batch,), jnp.float32, 0.0, max_steps - 1.0)
    out_f = jax.block_until_ready(
        diffusion_embedding_forward(steps_f, embedding, params))
    ref_f = _reference_lerp(steps_f, embedding, params)
    assert jnp.allclose(out_f, ref_f, atol=3e-2, rtol=3e-2), \
        float(jnp.abs(out_f - ref_f).max())

    print("KERNEL_OK")
</pallas_src>

<mosaic_0001>
module attributes {stable_mosaic.version = 11 : i64} {
  func.func @_int_kernel(%arg0: i32, %arg1: memref<8x1xi32, #tpu.memory_space<vmem>>, %arg2: memref<128x128xbf16, #tpu.memory_space<vmem>>, %arg3: memref<128x128xbf16, #tpu.memory_space<vmem>>, %arg4: memref<1x128xf32, #tpu.memory_space<vmem>>, %arg5: memref<8x128xf32, #tpu.memory_space<vmem>>) attributes {dimension_semantics = [#tpu.dimension_semantics<parallel>], iteration_bounds = array<i64: 1>, scalar_prefetch = 0 : i64, scratch_operands = 0 : i64, tpu.core_type = #tpu.core_type<tc>, window_params = [{transform_indices = @transform_0, window_bounds = array<i64: 8, 1>}, {pipeline_mode = #tpu.pipeline_mode<synchronous>, transform_indices = @transform_1, window_bounds = array<i64: 128, 128>}, {pipeline_mode = #tpu.pipeline_mode<synchronous>, transform_indices = @transform_2, window_bounds = array<i64: 128, 128>}, {pipeline_mode = #tpu.pipeline_mode<synchronous>, transform_indices = @transform_3, window_bounds = array<i64: 1, 128>}, {transform_indices = @transform_4, window_bounds = array<i64: 8, 128>}]} {
    %0 = tpu.iota {dimensions = array<i32: 1>} : vector<8x128xi32>
    %c0 = arith.constant 0 : index
    %c0_0 = arith.constant 0 : index
    %1 = vector.load %arg1[%c0, %c0_0] : memref<8x1xi32, #tpu.memory_space<vmem>>, vector<8x1xi32>
    %2 = vector.broadcast %1 : vector<8x1xi32> to vector<8x128xi32>
    %3 = arith.cmpi eq, %0, %2 : vector<8x128xi32>
    %cst = arith.constant 1.000000e+00 : f32
    %cst_1 = arith.constant 0.000000e+00 : f32
    %4 = vector.broadcast %cst : f32 to vector<8x128xf32>
    %5 = vector.broadcast %cst_1 : f32 to vector<8x128xf32>
    %6 = arith.select %3, %4, %5 : vector<8x128xi1>, vector<8x128xf32>
    %7 = arith.truncf %6 : vector<8x128xf32> to vector<8x128xbf16>
    %c0_2 = arith.constant 0 : index
    %c0_3 = arith.constant 0 : index
    %8 = vector.load %arg2[%c0_2, %c0_3] : memref<128x128xbf16, #tpu.memory_space<vmem>>, vector<128x128xbf16>
    %cst_4 = arith.constant dense<0.000000e+00> : vector<8x128xf32>
    %9 = tpu.matmul %7, %8, %cst_4 {dimension_numbers = #tpu.dot_dimension_numbers<[1], [0], [0], [1], [0, 0, 1, 1], [], []>} : vector<8x128xbf16>, vector<128x128xbf16>, vector<8x128xf32> -> vector<8x128xf32>
    %cst_5 = arith.constant 0.000000e+00 : f32
    %10 = vector.broadcast %cst_5 : f32 to vector<8x128xf32>
    %11 = arith.subf %10, %9 : vector<8x128xf32>
    %12 = math.exp %11 : vector<8x128xf32>
    %cst_6 = arith.constant 1.000000e+00 : f32
    %13 = vector.broadcast %cst_6 : f32 to vector<8x128xf32>
    %14 = arith.addf %13, %12 : vector<8x128xf32>
    %15 = tpu.reciprocal %14 {approx = true} : vector<8x128xf32> -> vector<8x128xf32>
    %16 = arith.mulf %9, %15 : vector<8x128xf32>
    %17 = arith.truncf %16 : vector<8x128xf32> to vector<8x128xbf16>
    %c0_7 = arith.constant 0 : index
    %c0_8 = arith.constant 0 : index
    %18 = vector.load %arg3[%c0_7, %c0_8] : memref<128x128xbf16, #tpu.memory_space<vmem>>, vector<128x128xbf16>
    %cst_9 = arith.constant dense<0.000000e+00> : vector<8x128xf32>
    %19 = tpu.matmul %17, %18, %cst_9 {dimension_numbers = #tpu.dot_dimension_numbers<[1], [0], [0], [1], [0, 0, 1, 1], [], []>} : vector<8x128xbf16>, vector<128x128xbf16>, vector<8x128xf32> -> vector<8x128xf32>
    %c0_10 = arith.constant 0 : index
    %c0_11 = arith.constant 0 : index
    %20 = vector.load %arg4[%c0_10, %c0_11] : memref<1x128xf32, #tpu.memory_space<vmem>>, vector<1x128xf32>
    %21 = vector.broadcast %20 : vector<1x128xf32> to vector<8x128xf32>
    %22 = arith.addf %19, %21 : vector<8x128xf32>
    %cst_12 = arith.constant 0.000000e+00 : f32
    %23 = vector.broadcast %cst_12 : f32 to vector<8x128xf32>
    %24 = arith.subf %23, %22 : vector<8x128xf32>
    %25 = math.exp %24 : vector<8x128xf32>
    %cst_13 = arith.constant 1.000000e+00 : f32
    %26 = vector.broadcast %cst_13 : f32 to vector<8x128xf32>
    %27 = arith.addf %26, %25 : vector<8x128xf32>
    %28 = tpu.reciprocal %27 {approx = true} : vector<8x128xf32> -> vector<8x128xf32>
    %29 = arith.mulf %22, %28 : vector<8x128xf32>
    %c0_14 = arith.constant 0 : index
    %c0_15 = arith.constant 0 : index
    %30 = vector.load %arg5[%c0_14, %c0_15] : memref<8x128xf32, #tpu.memory_space<vmem>>, vector<8x128xf32>
    tpu.vector_store %arg5[%c0_14, %c0_15], %29 {strides = array<i32>} : memref<8x128xf32, #tpu.memory_space<vmem>>, vector<8x128xf32>,
    return
  }
  func.func @transform_0(%arg0: i32) -> (i32, i32) {
    %c0_i32 = arith.constant 0 : i32
    %c0_i32_0 = arith.constant 0 : i32
    return %arg0, %c0_i32 : i32, i32
  }
  func.func @transform_1(%arg0: i32) -> (i32, i32) {
    %c0_i32 = arith.constant 0 : i32
    %c0_i32_0 = arith.constant 0 : i32
    %c0_i32_1 = arith.constant 0 : i32
    return %c0_i32, %c0_i32_0 : i32, i32
  }
  func.func @transform_2(%arg0: i32) -> (i32, i32) {
    %c0_i32 = arith.constant 0 : i32
    %c0_i32_0 = arith.constant 0 : i32
    %c0_i32_1 = arith.constant 0 : i32
    return %c0_i32, %c0_i32_0 : i32, i32
  }
  func.func @transform_3(%arg0: i32) -> (i32, i32) {
    %c0_i32 = arith.constant 0 : i32
    %c0_i32_0 = arith.constant 0 : i32
    %c0_i32_1 = arith.constant 0 : i32
    return %c0_i32, %c0_i32_0 : i32, i32
  }
  func.func @transform_4(%arg0: i32) -> (i32, i32) {
    %c0_i32 = arith.constant 0 : i32
    %c0_i32_0 = arith.constant 0 : i32
    return %arg0, %c0_i32 : i32, i32
  }
}

</mosaic_0001>

<llo_original>
// kernel: tpu_custom_call.1
$region0: #{tpu_custom_call.1}
  #allocation0 [shape = 'u32[]', space=smem, size = 0x4, offset = 0x4, fixed_abs, tag = 'smem constant byte address 0x4 - core index']
  #allocation1 [shape = 'u32[144,128]{1,0:T(1,128)}', space=vmem, size = 0x12000, scoped, tag = 'internal scratch']
  %s0 = inlined_call_operand.vmem [shape: s32[8,1], index: 0, kind: input, shape index: {}]
  %s1 = inlined_call_operand.hbm [shape: bf16[128,128], index: 1, kind: input, shape index: {}]
  %s2 = inlined_call_operand.hbm [shape: bf16[128,128], index: 2, kind: input, shape index: {}]
  %s3 = inlined_call_operand.vmem [shape: f32[1,128], index: 3, kind: input, shape index: {}]
  %s4 = inlined_call_operand.hbm [shape: f32[8,128], index: 4, kind: output, shape index: {}]
  %s5 = sld [smem:[#allocation0]]
  $region34: #{tpu_custom_call.1} parent=0
    _
  %s7 = ssub.s32 1, %s5
  %s8 = scalar_select 0, %s7, %s5
  $region1: #{tpu_custom_call.1} parent=0
    #allocation2 [shape = 'u8[32768]{0}', space=vmem, size = 0x8000, scoped, tag = 'input window, operand 1, single buffered']
    #allocation3 [shape = 's32[1]{0}', space=sflag, size = 0x4, scoped, tag = 'scoped memory for tpu_custom_call.1']
    #allocation4 [shape = 's32[1]{0}', space=sflag, size = 0x4, scoped, tag = 'scoped memory for tpu_custom_call.1']
    #allocation5 [shape = 'u8[32768]{0}', space=vmem, size = 0x8000, scoped, tag = 'input window, operand 2, single buffered']
    #allocation6 [shape = 's32[1]{0}', space=sflag, size = 0x4, scoped, tag = 'scoped memory for tpu_custom_call.1']
    #allocation7 [shape = 'u8[4096]{0}', space=vmem, size = 0x1000, scoped, tag = 'output window, operand 0, single buffered']
    %9 = vsyncpa [#allocation3], 0
    %10 = vsyncpa [#allocation6], 0
    %11 = vsyncpa [#allocation4], 0
    // Predicated region
    $region2: #{tpu_custom_call.1} parent=1 // pred_check
      _
    $region3: #{tpu_custom_call.1} parent=1 // pred_check_branch
      %13 = sbr.rel (0) target = $region5
    $region4: #{tpu_custom_call.1} parent=1 // pred_region
      _
    $region5: #{tpu_custom_call.1} parent=1 // pred_fallthru
      _
    // Predicated region
    $region6: #{tpu_custom_call.1} parent=1 // pred_check
      _
    $region7: #{tpu_custom_call.1} parent=1 // pred_check_branch
      %15 = sbr.rel (0) target = $region9
    $region8: #{tpu_custom_call.1} parent=1 // pred_region
      %s17 = ssub.s32 1024, 1024
      %18 = vsyncadd [#allocation3], %s17
      %s19 = sshll.u32 [#allocation2], 4
      %s20 = int_to_ptr.vmem [resolvable:$true] %s19
      %25 = dma.hbm_to_vmem [thread:$0]  %s1, 1024, %s20, [#allocation3], 64, 64, 4
    $region9: #{tpu_custom_call.1} parent=1 // pred_fallthru
      _
    // Predicated region
    $region10: #{tpu_custom_call.1} parent=1 // pred_check
      _
    $region11: #{tpu_custom_call.1} parent=1 // pred_check_branch
      %27 = sbr.rel (0) target = $region13
    $region12: #{tpu_custom_call.1} parent=1 // pred_region
      %s29 = ssub.s32 1024, 1024
      %30 = vsyncadd [#allocation6], %s29
      %s31 = sshll.u32 [#allocation5], 4
      %s32 = int_to_ptr.vmem [resolvable:$true] %s31
      %37 = dma.hbm_to_vmem [thread:$0]  %s2, 1024, %s32, [#allocation6], 64, 64, 4
    $region13: #{tpu_custom_call.1} parent=1 // pred_fallthru
      _
    // Predicated region
    $region14: #{tpu_custom_call.1} parent=1 // pred_check
      _
    $region15: #{tpu_custom_call.1} parent=1 // pred_check_branch
      %39 = sbr.rel (0) target = $region17
    $region16: #{tpu_custom_call.1} parent=1 // pred_region
      _
    $region17: #{tpu_custom_call.1} parent=1 // pred_fallthru
      _
    // Predicated region
    $region18: #{tpu_custom_call.1} parent=1 // pred_check
      _
    $region19: #{tpu_custom_call.1} parent=1 // pred_check_branch
      %41 = sbr.rel (0) target = $region21
    $region20: #{tpu_custom_call.1} parent=1 // pred_region
      %42 = dma.done [#allocation3], 1024
    $region21: #{tpu_custom_call.1} parent=1 // pred_fallthru
      _
    // Predicated region
    $region22: #{tpu_custom_call.1} parent=1 // pred_check
      _
    $region23: #{tpu_custom_call.1} parent=1 // pred_check_branch
      %44 = sbr.rel (0) target = $region25
    $region24: #{tpu_custom_call.1} parent=1 // pred_region
      %45 = dma.done [#allocation6], 1024
    $region25: #{tpu_custom_call.1} parent=1 // pred_fallthru
      _
    %v47 = vlaneseq
    %v48 = vand.u32 %v47, 127
    %v49 = vld [vmem:[%s0] sm:$0xff]
    %50 = vset.pattern.permute.xlu0 0
    %51 = vperm.xlu0 %50, %v49
    %v52 = vpop.permute.xlu0 %51
    %vm53 = vcmp.eq.s32.totalorder %v48, %v52
    %v54 = vsel %vm53, 1.0, 0.0
    %v55 = vpack.c.bf16 %v54, %v54
    %v56 = vld [vmem:[#allocation2] sm:$0xf]
    %v57 = vld [vmem:[#allocation2 + $0x4] sm:$0xf]
    %v58 = vld [vmem:[#allocation2 + $0x8] sm:$0xf]
    %v59 = vld [vmem:[#allocation2 + $0xc] sm:$0xf]
    %v60 = vld [vmem:[#allocation2 + $0x10] sm:$0xf]
    %v61 = vld [vmem:[#allocation2 + $0x14] sm:$0xf]
    %v62 = vld [vmem:[#allocation2 + $0x18] sm:$0xf]
    %v63 = vld [vmem:[#allocation2 + $0x1c] sm:$0xf]
    %v64 = vld [vmem:[#allocation2 + $0x20] sm:$0xf]
    %v65 = vld [vmem:[#allocation2 + $0x24] sm:$0xf]
    %v66 = vld [vmem:[#allocation2 + $0x28] sm:$0xf]
    %v67 = vld [vmem:[#allocation2 + $0x2c] sm:$0xf]
    %v68 = vld [vmem:[#allocation2 + $0x30] sm:$0xf]
    %v69 = vld [vmem:[#allocation2 + $0x34] sm:$0xf]
    %v70 = vld [vmem:[#allocation2 + $0x38] sm:$0xf]
    %v71 = vld [vmem:[#allocation2 + $0x3c] sm:$0xf]
    %v88 = vunpack.c.l.b16 %v56
    %v89 = vunpack.c.l.b16 %v57
    %v90 = vunpack.c.l.b16 %v58
    %v91 = vunpack.c.l.b16 %v59
    %v92 = vunpack.c.l.b16 %v60
    %v93 = vunpack.c.l.b16 %v61
    %v94 = vunpack.c.l.b16 %v62
    %v95 = vunpack.c.l.b16 %v63
    %v96 = vunpack.c.l.b16 %v64
    %v97 = vunpack.c.l.b16 %v65
    %v98 = vunpack.c.l.b16 %v66
    %v99 = vunpack.c.l.b16 %v67
    %v100 = vunpack.c.l.b16 %v68
    %v101 = vunpack.c.l.b16 %v69
    %v102 = vunpack.c.l.b16 %v70
    %v103 = vunpack.c.l.b16 %v71
    %v104 = vpack.c.b16 %v89, %v88
    %v105 = vpack.c.b16 %v91, %v90
    %v106 = vpack.c.b16 %v93, %v92
    %v107 = vpack.c.b16 %v95, %v94
    %v108 = vpack.c.b16 %v97, %v96
    %v109 = vpack.c.b16 %v99, %v98
    %v110 = vpack.c.b16 %v101, %v100
    %v111 = vpack.c.b16 %v103, %v102
    %120 = vmatprep.subr.bf16.mxu0 0
    %121 = vmatpush1.bf16.msra.mxu0 %v104
    %122 = vmatprep.subr.bf16.mxu0 0
    %123 = vmatpush1.bf16.msra.mxu0 %v105
    %124 = vmatprep.subr.bf16.mxu0 0
    %125 = vmatpush1.bf16.msra.mxu0 %v106
    %126 = vmatprep.subr.bf16.mxu0 0
    %127 = vmatpush1.bf16.msra.mxu0 %v107
    %128 = vmatprep.subr.bf16.mxu0 0
    %129 = vmatpush1.bf16.msra.mxu0 %v108
    %130 = vmatprep.subr.bf16.mxu0 0
    %131 = vmatpush1.bf16.msra.mxu0 %v109
    %132 = vmatprep.subr.bf16.mxu0 0
    %133 = vmatpush1.bf16.msra.mxu0 %v110
    %134 = vmatprep.subr.bf16.mxu0 0
    %135 = vmatpush1.bf16.msra.mxu0 %v111
    %136 = vmatprep.subr.bf16.mxu0 0
    %137 = vmatpush1.bf16.msra.mxu0 0
    %138 = vmatprep.subr.bf16.mxu0 0
    %139 = vmatpush1.bf16.msra.mxu0 0
    %140 = vmatprep.subr.bf16.mxu0 0
    %141 = vmatpush1.bf16.msra.mxu0 0
    %142 = vmatprep.subr.bf16.mxu0 0
    %143 = vmatpush1.bf16.msra.mxu0 0
    %144 = vmatprep.subr.bf16.mxu0 0
    %145 = vmatpush1.bf16.msra.mxu0 0
    %146 = vmatprep.subr.bf16.mxu0 0
    %147 = vmatpush1.bf16.msra.mxu0 0
    %148 = vmatprep.subr.bf16.mxu0 0
    %149 = vmatpush1.bf16.msra.mxu0 0
    %150 = vmatprep.subr.bf16.mxu0 0
    %151 = vmatpush1.bf16.msra.mxu0 0
    %152 = vmatprep.mubr.bf16.mxu0 0
    %153 = vmatmul.mubr.bf16.gmra.mrb[0].mxu0 %v55
    %v154 = vpop.f32.mrb[0].mxu0
    %v155 = vadd.f32 0.0, %v154
    %v156 = vpop.f32.mrb[0].mxu0
    %v157 = vpop.f32.mrb[0].mxu0
    %v158 = vpop.f32.mrb[0].mxu0
    %159 = vdwg.mxu0
    %v160 = vsub.f32 0.0, %v155
    %v161 = vmul.f32 %v160, 1.442695
    %v162 = vpow.pop %v161
    %v163 = vadd.f32 %v162, 1.0
    %v164 = vrcp.pop %v163
    %v165 = vmul.f32 %v155, %v164
    %v166 = vpack.c.bf16 %v165, %v165
    %v167 = vld [vmem:[#allocation5] sm:$0xf]
    %v168 = vld [vmem:[#allocation5 + $0x4] sm:$0xf]
    %v169 = vld [vmem:[#allocation5 + $0x8] sm:$0xf]
    %v170 = vld [vmem:[#allocation5 + $0xc] sm:$0xf]
    %v171 = vld [vmem:[#allocation5 + $0x10] sm:$0xf]
    %v172 = vld [vmem:[#allocation5 + $0x14] sm:$0xf]
    %v173 = vld [vmem:[#allocation5 + $0x18] sm:$0xf]
    %v174 = vld [vmem:[#allocation5 + $0x1c] sm:$0xf]
    %v175 = vld [vmem:[#allocation5 + $0x20] sm:$0xf]
    %v176 = vld [vmem:[#allocation5 + $0x24] sm:$0xf]
    %v177 = vld [vmem:[#allocation5 + $0x28] sm:$0xf]
    %v178 = vld [vmem:[#allocation5 + $0x2c] sm:$0xf]
    %v179 = vld [vmem:[#allocation5 + $0x30] sm:$0xf]
    %v180 = vld [vmem:[#allocation5 + $0x34] sm:$0xf]
    %v181 = vld [vmem:[#allocation5 + $0x38] sm:$0xf]
    %v182 = vld [vmem:[#allocation5 + $0x3c] sm:$0xf]
    %v183 = vld [vmem:[%s3] sm:$0x1]
    %v185 = vlaneseq
    %v186 = vshrl.u32 %v185, 7
    %v187 = vsub.s32 0, %v186
    %v188 = vrot.slane %v183, %v187
    %v206 = vunpack.c.l.b16 %v167
    %v207 = vunpack.c.l.b16 %v168
    %v208 = vunpack.c.l.b16 %v169
    %v209 = vunpack.c.l.b16 %v170
    %v210 = vunpack.c.l.b16 %v171
    %v211 = vunpack.c.l.b16 %v172
    %v212 = vunpack.c.l.b16 %v173
    %v213 = vunpack.c.l.b16 %v174
    %v214 = vunpack.c.l.b16 %v175
    %v215 = vunpack.c.l.b16 %v176
    %v216 = vunpack.c.l.b16 %v177
    %v217 = vunpack.c.l.b16 %v178
    %v218 = vunpack.c.l.b16 %v179
    %v219 = vunpack.c.l.b16 %v180
    %v220 = vunpack.c.l.b16 %v181
    %v221 = vunpack.c.l.b16 %v182
    %v222 = vpack.c.b16 %v207, %v206
    %v223 = vpack.c.b16 %v209, %v208
    %v224 = vpack.c.b16 %v211, %v210
    %v225 = vpack.c.b16 %v213, %v212
    %v226 = vpack.c.b16 %v215, %v214
    %v227 = vpack.c.b16 %v217, %v216
    %v228 = vpack.c.b16 %v219, %v218
    %v229 = vpack.c.b16 %v221, %v220
    %238 = vmatprep.subr.bf16.mxu0 0
    %239 = vmatpush1.bf16.msra.mxu0 %v222
    %240 = vmatprep.subr.bf16.mxu0 0
    %241 = vmatpush1.bf16.msra.mxu0 %v223
    %242 = vmatprep.subr.bf16.mxu0 0
    %243 = vmatpush1.bf16.msra.mxu0 %v224
    %244 = vmatprep.subr.bf16.mxu0 0
    %245 = vmatpush1.bf16.msra.mxu0 %v225
    %246 = vmatprep.subr.bf16.mxu0 0
    %247 = vmatpush1.bf16.msra.mxu0 %v226
    %248 = vmatprep.subr.bf16.mxu0 0
    %249 = vmatpush1.bf16.msra.mxu0 %v227
    %250 = vmatprep.subr.bf16.mxu0 0
    %251 = vmatpush1.bf16.msra.mxu0 %v228
    %252 = vmatprep.subr.bf16.mxu0 0
    %253 = vmatpush1.bf16.msra.mxu0 %v229
    %254 = vmatprep.subr.bf16.mxu0 0
    %255 = vmatpush1.bf16.msra.mxu0 0
    %256 = vmatprep.subr.bf16.mxu0 0
    %257 = vmatpush1.bf16.msra.mxu0 0
    %258 = vmatprep.subr.bf16.mxu0 0
    %259 = vmatpush1.bf16.msra.mxu0 0
    %260 = vmatprep.subr.bf16.mxu0 0
    %261 = vmatpush1.bf16.msra.mxu0 0
    %262 = vmatprep.subr.bf16.mxu0 0
    %263 = vmatpush1.bf16.msra.mxu0 0
    %264 = vmatprep.subr.bf16.mxu0 0
    %265 = vmatpush1.bf16.msra.mxu0 0
    %266 = vmatprep.subr.bf16.mxu0 0
    %267 = vmatpush1.bf16.msra.mxu0 0
    %268 = vmatprep.subr.bf16.mxu0 0
    %269 = vmatpush1.bf16.msra.mxu0 0
    %270 = vmatprep.mubr.bf16.mxu0 0
    %271 = vmatmul.mubr.bf16.gmra.mrb[0].mxu0 %v166
    %v272 = vpop.f32.mrb[0].mxu0
    %v273 = vadd.f32 %v188, %v272
    %v274 = vpop.f32.mrb[0].mxu0
    %v275 = vpop.f32.mrb[0].mxu0
    %v276 = vpop.f32.mrb[0].mxu0
    %277 = vdwg.mxu0
    %v278 = vsub.f32 0.0, %v273
    %v279 = vmul.f32 %v278, 1.442695
    %v280 = vpow.pop %v279
    %v281 = vadd.f32 %v280, 1.0
    %v282 = vrcp.pop %v281
    %v283 = vmul.f32 %v273, %v282
    %284 = vst [vmem:[#allocation7] sm:$0xff] %v283
    // Predicated region
    $region26: #{tpu_custom_call.1} parent=1 // pred_check
      _
    $region27: #{tpu_custom_call.1} parent=1 // pred_check_branch
      %286 = sbr.rel (0) target = $region29
    $region28: #{tpu_custom_call.1} parent=1 // pred_region
      %s288 = ssub.s32 128, 128
      %289 = vsyncadd [#allocation4], %s288
      %s291 = sshll.u32 [#allocation7], 4
      %s292 = int_to_ptr.vmem [resolvable:$true] %s291
      %294 = dma.vmem_to_hbm [thread:$0]  %s292, 128, %s4, [#allocation4]
    $region29: #{tpu_custom_call.1} parent=1 // pred_fallthru
      _
    // Predicated region
    $region30: #{tpu_custom_call.1} parent=1 // pred_check
      _
    $region31: #{tpu_custom_call.1} parent=1 // pred_check_branch
      %296 = sbr.rel (0) target = $region33
    $region32: #{tpu_custom_call.1} parent=1 // pred_region
      %297 = dma.done [#allocation4], 128
    $region33: #{tpu_custom_call.1} parent=1 // pred_fallthru
      _
    %298 = vsyncpa [#allocation3], 1
    %299 = vsyncpa [#allocation6], 1
    %300 = vsyncpa [#allocation4], 1

</llo_original>
